<compile_context>
chip_gen: v5e
topology: v5e:2x2
jax: 0.10.0
libtpu: 0.0.40
codegen_flags: <defaults>
</compile_context>

<pallas_src>
import functools

import numpy as np
import jax
import jax.numpy as jnp
from jax import lax
from jax.experimental import pallas as pl
from jax.experimental.pallas import tpu as pltpu

HINT_BUDGET = 0.3   # only used by the (stateful, training-time) lambda update
LMBDA = 0.1
EPS = 1e-12


def _round_up(n, m):
    return ((n + m - 1) // m) * m


def _confidence_loss_kernel(logits_ref, conf_ref, tgt_ref, b_ref, part_ref, *,
                            batch, block_rows):
    i = pl.program_id(0)

    logits = logits_ref[...].astype(jnp.float32)       # (TB, C)
    conf_logit = conf_ref[...].astype(jnp.float32)     # (TB, 1)
    b = b_ref[...].astype(jnp.float32)                 # (TB, 1) in {0., 1.}
    tgt = tgt_ref[...]                                 # (TB, 1) int32

    tb, c = logits.shape

    # Mask for padded tail rows (B need not be a multiple of the block size).
    row = i * block_rows + lax.broadcasted_iota(jnp.int32, (tb, 1), 0)
    valid = (row < batch).astype(jnp.float32)          # (TB, 1)

    # Numerically stable softmax — only the target column of the result is
    # needed, so the only O(B*C) transcendental work is the exp for the denom.
    m = jnp.max(logits, axis=-1, keepdims=True)        # (TB, 1)
    denom = jnp.sum(jnp.exp(logits - m), axis=-1, keepdims=True)  # (TB, 1)

    cls_iota = lax.broadcasted_iota(jnp.int32, (tb, c), 1)
    t1h = (cls_iota == tgt).astype(jnp.float32)        # (TB, C) one-hot(target)
    logit_t = jnp.sum(logits * t1h, axis=-1, keepdims=True)       # (TB, 1)
    p_t = jnp.exp(logit_t - m) / denom                 # (TB, 1) softmax[target]

    conf = 1.0 / (1.0 + jnp.exp(-conf_logit))          # (TB, 1) sigmoid

    # Matches torch.clamp(..., eps, 1 - eps); the upper clamp is a no-op in f32.
    p_t = jnp.clip(p_t, EPS, 1.0 - EPS)
    conf = jnp.clip(conf, EPS, 1.0 - EPS)

    conf_new = conf * b + 1.0 - b                      # (TB, 1)
    # Target column of pred_new = p_t * conf_new + 1 * (1 - conf_new).
    pred_new_t = p_t * conf_new + (1.0 - conf_new)     # (TB, 1)

    # Per-block partial sums; the tiny final reduce / mean happens in XLA.
    part_ref[0, 0] = jnp.sum(jnp.log(pred_new_t) * valid)
    part_ref[0, 1] = jnp.sum(jnp.log(conf_new) * valid)


def confidence_loss(x, target, key, *, lmbda=LMBDA, block_rows=None):
    """x: (B, C+1) float, target: (B,) int, key: jax PRNG key.

    Returns (loss_scalar, b) where b is the Bernoulli(0.5) mask used.
    """
    B, K = x.shape
    C = K - 1

    # Bernoulli(0.5) mask, same distribution as
    # torch.empty_like(conf).uniform_(0, 1).round().
    b = jnp.round(jax.random.uniform(key, (B, 1), dtype=jnp.float32))

    # Layout plumbing: lane-dense class-logit operand + width-1 confidence
    # operand instead of slicing the (B, C+1) array in-kernel.
    logits = x[:, :C]
    conf_logit = x[:, C:K]
    tgt = target.astype(jnp.int32).reshape(B, 1)

    itemsize = jnp.dtype(x.dtype).itemsize
    if block_rows is None:
        # Keep each logits block <= ~8 MiB so double-buffered DMA stays well
        # inside the default scoped-VMEM limit on every generation (incl. v7x).
        max_rows = max(8, ((8 * 1024 * 1024) // max(1, C * itemsize)) // 8 * 8)
        block_rows = min(_round_up(B, 8), max_rows, 2048)
    block_rows = max(8, _round_up(block_rows, 8))

    padded_b = _round_up(B, block_rows)
    grid = padded_b // block_rows
    pad = padded_b - B
    if pad:
        logits = jnp.pad(logits, ((0, pad), (0, 0)))
        conf_logit = jnp.pad(conf_logit, ((0, pad), (0, 0)))
        tgt = jnp.pad(tgt, ((0, pad), (0, 0)))
        b_in = jnp.pad(b, ((0, pad), (0, 0)))
    else:
        b_in = b

    kernel = functools.partial(_confidence_loss_kernel,
                               batch=B, block_rows=block_rows)

    partials = pl.pallas_call(
        kernel,
        out_shape=jax.ShapeDtypeStruct((grid, 2), jnp.float32),
        grid=(grid,),
        in_specs=[
            pl.BlockSpec((block_rows, C), lambda i: (i, 0)),   # class logits
            pl.BlockSpec((block_rows, 1), lambda i: (i, 0)),   # confidence logit
            pl.BlockSpec((block_rows, 1), lambda i: (i, 0)),   # target
            pl.BlockSpec((block_rows, 1), lambda i: (i, 0)),   # Bernoulli mask b
        ],
        out_specs=pl.BlockSpec((1, 2), lambda i: (i, 0),
                               memory_space=pltpu.MemorySpace.SMEM),
        compiler_params=pltpu.CompilerParams(
            dimension_semantics=("parallel",)),
    )(logits, conf_logit, tgt, b_in)

    pred_loss = -jnp.sum(partials[:, 0]) / B
    conf_loss = -jnp.sum(partials[:, 1]) / B
    loss = pred_loss + lmbda * conf_loss
    # TODO(synk): the stateful training-time lambda schedule (_update_lmbda)
    # depends on model.training and mutates Python state; it stays host-side.
    return loss, b[:, 0]


def _reference_loss(x, target, b, lmbda=LMBDA):
    """Pure-JAX reference of the PyTorch forward, given the same Bernoulli b."""
    logits = x[:, :-1].astype(jnp.float32)
    conf_logit = x[:, -1].astype(jnp.float32)
    pred = jax.nn.softmax(logits, axis=-1)
    conf = jax.nn.sigmoid(conf_logit)
    pred = jnp.clip(pred, EPS, 1.0 - EPS)
    conf = jnp.clip(conf, EPS, 1.0 - EPS)
    conf_new = conf * b + 1.0 - b
    t1h = jax.nn.one_hot(target, logits.shape[-1], dtype=jnp.float32)
    pred_new = pred * conf_new[:, None] + t1h * (1.0 - conf_new[:, None])
    logp = jnp.log(pred_new)
    pred_loss = -jnp.mean(jnp.take_along_axis(logp, target[:, None], axis=-1))
    conf_loss = -jnp.mean(jnp.log(conf_new))
    return pred_loss + lmbda * conf_loss


if __name__ == "__main__":
    # Case 1: B=8, 16 classes (+1 confidence logit).
    B, num_classes = 8, 16
    K = num_classes + 1
    key = jax.random.PRNGKey(0)
    kx, kt, kb = jax.random.split(key, 3)
    x = jax.random.normal(kx, (B, K), dtype=jnp.float32)
    target = jax.random.randint(kt, (B,), 0, num_classes, dtype=jnp.int32)

    loss, b = confidence_loss(x, target, kb)
    loss = jax.block_until_ready(loss)
    b = jax.block_until_ready(b)
    ref = _reference_loss(x, target, b)
    np.testing.assert_allclose(np.asarray(loss), np.asarray(ref),
                               rtol=1e-5, atol=1e-5)
    assert np.isfinite(np.asarray(loss))

    # Case 2: ragged batch (not a multiple of the block) + multi-block grid.
    B2, C2 = 13, 5
    k2x, k2t, k2b = jax.random.split(jax.random.PRNGKey(1), 3)
    x2 = jax.random.normal(k2x, (B2, C2 + 1), dtype=jnp.float32)
    t2 = jax.random.randint(k2t, (B2,), 0, C2, dtype=jnp.int32)
    loss2, b2 = confidence_loss(x2, t2, k2b, block_rows=8)
    loss2 = jax.block_until_ready(loss2)
    b2 = jax.block_until_ready(b2)
    ref2 = _reference_loss(x2, t2, b2)
    np.testing.assert_allclose(np.asarray(loss2), np.asarray(ref2),
                               rtol=1e-5, atol=1e-5)

    print("KERNEL_OK")
</pallas_src>

<mosaic_0001>
module attributes {stable_mosaic.version = 11 : i64} {
  func.func @_confidence_loss_kernel(%arg0: i32, %arg1: memref<8x16xf32, #tpu.memory_space<vmem>>, %arg2: memref<8x1xf32, #tpu.memory_space<vmem>>, %arg3: memref<8x1xi32, #tpu.memory_space<vmem>>, %arg4: memref<8x1xf32, #tpu.memory_space<vmem>>, %arg5: memref<1x2xf32, #tpu.memory_space<smem>>) attributes {dimension_semantics = [#tpu.dimension_semantics<parallel>], iteration_bounds = array<i64: 1>, scalar_prefetch = 0 : i64, scratch_operands = 0 : i64, tpu.core_type = #tpu.core_type<tc>, window_params = [{transform_indices = @transform_0, window_bounds = array<i64: 8, 16>}, {transform_indices = @transform_1, window_bounds = array<i64: 8, 1>}, {transform_indices = @transform_2, window_bounds = array<i64: 8, 1>}, {transform_indices = @transform_3, window_bounds = array<i64: 8, 1>}, {transform_indices = @transform_4, window_bounds = array<i64: 1, 2>}]} {
    %c0 = arith.constant 0 : index
    %c0_0 = arith.constant 0 : index
    %0 = vector.load %arg1[%c0, %c0_0] : memref<8x16xf32, #tpu.memory_space<vmem>>, vector<8x16xf32>
    %c0_1 = arith.constant 0 : index
    %c0_2 = arith.constant 0 : index
    %1 = vector.load %arg2[%c0_1, %c0_2] : memref<8x1xf32, #tpu.memory_space<vmem>>, vector<8x1xf32>
    %c0_3 = arith.constant 0 : index
    %c0_4 = arith.constant 0 : index
    %2 = vector.load %arg4[%c0_3, %c0_4] : memref<8x1xf32, #tpu.memory_space<vmem>>, vector<8x1xf32>
    %c0_5 = arith.constant 0 : index
    %c0_6 = arith.constant 0 : index
    %3 = vector.load %arg3[%c0_5, %c0_6] : memref<8x1xi32, #tpu.memory_space<vmem>>, vector<8x1xi32>
    %c8_i32 = arith.constant 8 : i32
    %4 = arith.muli %arg0, %c8_i32 : i32
    %5 = tpu.iota {dimensions = array<i32: 0>} : vector<8x1xi32>
    %6 = vector.broadcast %4 : i32 to vector<8x1xi32>
    %7 = arith.addi %6, %5 : vector<8x1xi32>
    %c8_i32_7 = arith.constant 8 : i32
    %8 = vector.broadcast %c8_i32_7 : i32 to vector<8x1xi32>
    %9 = arith.cmpi slt, %7, %8 : vector<8x1xi32>
    %10 = arith.extui %9 : vector<8x1xi1> to vector<8x1xi32>
    %11 = arith.sitofp %10 : vector<8x1xi32> to vector<8x1xf32>
    %cst = arith.constant dense<0xFF800000> : vector<8xf32>
    %12 = vector.multi_reduction <maximumf>, %0, %cst [1] : vector<8x16xf32> to vector<8xf32>
    %13 = vector.shape_cast %12 : vector<8xf32> to vector<8x1xf32>
    %14 = vector.broadcast %13 : vector<8x1xf32> to vector<8x16xf32>
    %15 = arith.subf %0, %14 : vector<8x16xf32>
    %16 = math.exp %15 : vector<8x16xf32>
    %cst_8 = arith.constant dense<0.000000e+00> : vector<8xf32>
    %17 = vector.multi_reduction <add>, %16, %cst_8 [1] : vector<8x16xf32> to vector<8xf32>
    %18 = vector.shape_cast %17 : vector<8xf32> to vector<8x1xf32>
    %19 = tpu.iota {dimensions = array<i32: 1>} : vector<8x16xi32>
    %20 = vector.broadcast %3 : vector<8x1xi32> to vector<8x16xi32>
    %21 = arith.cmpi eq, %19, %20 : vector<8x16xi32>
    %22 = arith.extui %21 : vector<8x16xi1> to vector<8x16xi32>
    %23 = arith.sitofp %22 : vector<8x16xi32> to vector<8x16xf32>
    %24 = arith.mulf %0, %23 : vector<8x16xf32>
    %cst_9 = arith.constant dense<0.000000e+00> : vector<8xf32>
    %25 = vector.multi_reduction <add>, %24, %cst_9 [1] : vector<8x16xf32> to vector<8xf32>
    %26 = vector.shape_cast %25 : vector<8xf32> to vector<8x1xf32>
    %27 = arith.subf %26, %13 : vector<8x1xf32>
    %28 = math.exp %27 : vector<8x1xf32>
    %29 = arith.divf %28, %18 : vector<8x1xf32>
    %cst_10 = arith.constant 0.000000e+00 : f32
    %30 = vector.broadcast %cst_10 : f32 to vector<8x1xf32>
    %31 = arith.subf %30, %1 : vector<8x1xf32>
    %32 = math.exp %31 : vector<8x1xf32>
    %cst_11 = arith.constant 1.000000e+00 : f32
    %33 = vector.broadcast %cst_11 : f32 to vector<8x1xf32>
    %34 = arith.addf %33, %32 : vector<8x1xf32>
    %cst_12 = arith.constant 1.000000e+00 : f32
    %35 = vector.broadcast %cst_12 : f32 to vector<8x1xf32>
    %36 = arith.divf %35, %34 : vector<8x1xf32>
    %cst_13 = arith.constant 9.99999996E-13 : f32
    %cst_14 = arith.constant 1.000000e+00 : f32
    %37 = vector.broadcast %cst_13 : f32 to vector<8x1xf32>
    %38 = arith.maximumf %37, %29 : vector<8x1xf32>
    %39 = vector.broadcast %cst_14 : f32 to vector<8x1xf32>
    %40 = arith.minimumf %39, %38 : vector<8x1xf32>
    %cst_15 = arith.constant 9.99999996E-13 : f32
    %cst_16 = arith.constant 1.000000e+00 : f32
    %41 = vector.broadcast %cst_15 : f32 to vector<8x1xf32>
    %42 = arith.maximumf %41, %36 : vector<8x1xf32>
    %43 = vector.broadcast %cst_16 : f32 to vector<8x1xf32>
    %44 = arith.minimumf %43, %42 : vector<8x1xf32>
    %45 = arith.mulf %44, %2 : vector<8x1xf32>
    %cst_17 = arith.constant 1.000000e+00 : f32
    %46 = vector.broadcast %cst_17 : f32 to vector<8x1xf32>
    %47 = arith.addf %45, %46 : vector<8x1xf32>
    %48 = arith.subf %47, %2 : vector<8x1xf32>
    %49 = arith.mulf %40, %48 : vector<8x1xf32>
    %cst_18 = arith.constant 1.000000e+00 : f32
    %50 = vector.broadcast %cst_18 : f32 to vector<8x1xf32>
    %51 = arith.subf %50, %48 : vector<8x1xf32>
    %52 = arith.addf %49, %51 : vector<8x1xf32>
    %53 = math.log %52 : vector<8x1xf32>
    %54 = arith.mulf %53, %11 : vector<8x1xf32>
    %55 = vector.shape_cast %54 : vector<8x1xf32> to vector<1x8x1xf32>
    %cst_19 = arith.constant dense<0.000000e+00> : vector<1xf32>
    %56 = vector.multi_reduction <add>, %55, %cst_19 [1, 2] : vector<1x8x1xf32> to vector<1xf32>
    %57 = vector.shape_cast %56 : vector<1xf32> to vector<1x1x1xf32>
    %58 = vector.extract %57[0, 0, 0] : f32 from vector<1x1x1xf32>
    %c0_20 = arith.constant 0 : index
    %c0_21 = arith.constant 0 : index
    %59 = memref.load %arg5[%c0_20, %c0_21] : memref<1x2xf32, #tpu.memory_space<smem>>
    memref.store %58, %arg5[%c0_20, %c0_21] : memref<1x2xf32, #tpu.memory_space<smem>>
    %60 = math.log %48 : vector<8x1xf32>
    %61 = arith.mulf %60, %11 : vector<8x1xf32>
    %62 = vector.shape_cast %61 : vector<8x1xf32> to vector<1x8x1xf32>
    %cst_22 = arith.constant dense<0.000000e+00> : vector<1xf32>
    %63 = vector.multi_reduction <add>, %62, %cst_22 [1, 2] : vector<1x8x1xf32> to vector<1xf32>
    %64 = vector.shape_cast %63 : vector<1xf32> to vector<1x1x1xf32>
    %65 = vector.extract %64[0, 0, 0] : f32 from vector<1x1x1xf32>
    %c0_23 = arith.constant 0 : index
    %c1 = arith.constant 1 : index
    %66 = memref.load %arg5[%c0_23, %c1] : memref<1x2xf32, #tpu.memory_space<smem>>
    memref.store %65, %arg5[%c0_23, %c1] : memref<1x2xf32, #tpu.memory_space<smem>>
    return
  }
  func.func @transform_0(%arg0: i32) -> (i32, i32) {
    %c0_i32 = arith.constant 0 : i32
    %c0_i32_0 = arith.constant 0 : i32
    return %arg0, %c0_i32 : i32, i32
  }
  func.func @transform_1(%arg0: i32) -> (i32, i32) {
    %c0_i32 = arith.constant 0 : i32
    %c0_i32_0 = arith.constant 0 : i32
    return %arg0, %c0_i32 : i32, i32
  }
  func.func @transform_2(%arg0: i32) -> (i32, i32) {
    %c0_i32 = arith.constant 0 : i32
    %c0_i32_0 = arith.constant 0 : i32
    return %arg0, %c0_i32 : i32, i32
  }
  func.func @transform_3(%arg0: i32) -> (i32, i32) {
    %c0_i32 = arith.constant 0 : i32
    %c0_i32_0 = arith.constant 0 : i32
    return %arg0, %c0_i32 : i32, i32
  }
  func.func @transform_4(%arg0: i32) -> (i32, i32) {
    %c0_i32 = arith.constant 0 : i32
    %c0_i32_0 = arith.constant 0 : i32
    return %arg0, %c0_i32 : i32, i32
  }
}

</mosaic_0001>

<llo_original>
// kernel: tpu_custom_call.1
$region0: #{tpu_custom_call.1}
  #allocation0 [shape = 'u32[]', space=smem, size = 0x4, offset = 0x4, fixed_abs, tag = 'smem constant byte address 0x4 - core index']
  #allocation1 [shape = 'u32[72,128]{1,0:T(1,128)}', space=vmem, size = 0x9000, scoped, tag = 'internal scratch']
  %s0 = inlined_call_operand.vmem [shape: f32[8,16], index: 0, kind: input, shape index: {}]
  %s1 = inlined_call_operand.vmem [shape: f32[8,1], index: 1, kind: input, shape index: {}]
  %s2 = inlined_call_operand.vmem [shape: s32[8,1], index: 2, kind: input, shape index: {}]
  %s3 = inlined_call_operand.vmem [shape: f32[8,1], index: 3, kind: input, shape index: {}]
  %s4 = inlined_call_operand.hbm [shape: f32[1,2], index: 4, kind: output, shape index: {}]
  %s5 = sld [smem:[#allocation0]]
  $region26: #{tpu_custom_call.1} parent=0
    _
  %s7 = ssub.s32 1, %s5
  %s8 = scalar_select 0, %s7, %s5
  $region1: #{tpu_custom_call.1} parent=0
    #allocation2 [shape = 'u8[512]{0}', space=smem, size = 0x200, scoped, tag = 'output window, operand 0, single buffered']
    #allocation3 [shape = 's32[1]{0}', space=sflag, size = 0x4, scoped, tag = 'scoped memory for tpu_custom_call.1']
    %9 = vsyncpa [#allocation3], 0
    // Predicated region
    $region2: #{tpu_custom_call.1} parent=1 // pred_check
      _
    $region3: #{tpu_custom_call.1} parent=1 // pred_check_branch
      %11 = sbr.rel (0) target = $region5
    $region4: #{tpu_custom_call.1} parent=1 // pred_region
      _
    $region5: #{tpu_custom_call.1} parent=1 // pred_fallthru
      _
    // Predicated region
    $region6: #{tpu_custom_call.1} parent=1 // pred_check
      _
    $region7: #{tpu_custom_call.1} parent=1 // pred_check_branch
      %13 = sbr.rel (0) target = $region9
    $region8: #{tpu_custom_call.1} parent=1 // pred_region
      _
    $region9: #{tpu_custom_call.1} parent=1 // pred_fallthru
      _
    // Predicated region
    $region10: #{tpu_custom_call.1} parent=1 // pred_check
      _
    $region11: #{tpu_custom_call.1} parent=1 // pred_check_branch
      %15 = sbr.rel (0) target = $region13
    $region12: #{tpu_custom_call.1} parent=1 // pred_region
      _
    $region13: #{tpu_custom_call.1} parent=1 // pred_fallthru
      _
    // Predicated region
    $region14: #{tpu_custom_call.1} parent=1 // pred_check
      _
    $region15: #{tpu_custom_call.1} parent=1 // pred_check_branch
      %17 = sbr.rel (0) target = $region17
    $region16: #{tpu_custom_call.1} parent=1 // pred_region
      _
    $region17: #{tpu_custom_call.1} parent=1 // pred_fallthru
      _
    %v18 = vld [vmem:[%s0] sm:$0xff]
    %v19 = vld [vmem:[%s1] sm:$0xff]
    %v20 = vld [vmem:[%s3] sm:$0xff]
    %v21 = vld [vmem:[%s2] sm:$0xff]
    %s22 = smul.u32 0, 8
    %v23 = vlaneseq
    %v24 = vshrl.u32 %v23, 7
    %v25 = vstv %s22
    %v26 = vadd.s32 %v25, %v24
    %vm27 = vcmp.lt.s32.totalorder %v26, 8
    %v28 = vsel %vm27, 1, 0
    %v29 = vcvt.s32.f32 %v28
    %vm30 = vcmask 130048
    %v31 = vsel %vm30, %v18, -inf
    %32 = vmax.xlane.f32.xlu0 %v31
    %v33 = vpop.xlane.xlu0 %32
    %v34 = vsub.f32 %v18, %v33
    %v35 = vmul.f32 %v34, 1.442695
    %v36 = vpow.pop %v35
    %v37 = vsel %vm30, %v36, 0.0
    %38 = vadd.xlane.f32.xlu0 %v37
    %v39 = vpop.xlane.xlu0 %38
    %v40 = vlaneseq
    %v41 = vand.u32 %v40, 127
    %42 = vset.pattern.permute.xlu0 0
    %43 = vperm.xlu0 %42, %v21
    %v44 = vpop.permute.xlu0 %43
    %vm45 = vcmp.eq.s32.totalorder %v41, %v44
    %v46 = vsel %vm45, 1, 0
    %v47 = vcvt.s32.f32 %v46
    %v48 = vmul.f32 %v18, %v47
    %v49 = vsel %vm30, %v48, 0.0
    %50 = vadd.xlane.f32.xlu0 %v49
    %v51 = vpop.xlane.xlu0 %50
    %v52 = vsub.f32 %v51, %v33
    %v53 = vmul.f32 %v52, 1.442695
    %v54 = vpow.pop %v53
    %v55 = vrcp.pop %v39
    %v56 = vmul.f32 %v39, %v55
    %v57 = vsub.f32 1.0, %v56
    %v58 = vmul.f32 %v55, %v57
    %v59 = vadd.f32 %v55, %v58
    %vm60 = vweird.f32 %v39
    %vm61 = vweird.f32 %v55
    %vm62 = vmor %vm60, %vm61
    %v63 = vsel %vm62, %v55, %v59
    %v64 = vand.u32 2147483647, %v39
    %vm65 = vcmp.eq.f32.partialorder %v64, 8.507059e+37
    %v66 = vand.u32 %v39, 2147483648
    %v67 = vor.u32 1.1754944e-38, %v66
    %v68 = vsel %vm65, %v67, %v63
    %v69 = vmul.f32 %v54, %v68
    %v70 = vsub.f32 0.0, %v19
    %v71 = vmul.f32 %v70, 1.442695
    %v72 = vpow.pop %v71
    %v73 = vadd.f32 %v72, 1.0
    %v74 = vrcp.pop %v73
    %v75 = vmul.f32 %v73, %v74
    %v76 = vsub.f32 1.0, %v75
    %v77 = vmul.f32 %v74, %v76
    %v78 = vadd.f32 %v74, %v77
    %vm79 = vweird.f32 %v73
    %vm80 = vweird.f32 %v74
    %vm81 = vmor %vm79, %vm80
    %v82 = vsel %vm81, %v74, %v78
    %v83 = vand.u32 2147483647, %v73
    %vm84 = vcmp.eq.f32.partialorder %v83, 8.507059e+37
    %v85 = vand.u32 %v73, 2147483648
    %v86 = vor.u32 1.1754944e-38, %v85
    %v87 = vsel %vm84, %v86, %v82
    %v88 = vmul.f32 1.0, %v87
    %v89 = vmax.f32 %v69, 1e-12
    %v90 = vmin.f32 %v89, 1.0
    %v91 = vmax.f32 %v88, 1e-12
    %v92 = vmin.f32 %v91, 1.0
    %v93 = vmul.f32 %v92, %v20
    %v94 = vadd.f32 %v93, 1.0
    %v95 = vsub.f32 %v94, %v20
    %v96 = vmul.f32 %v90, %v95
    %v97 = vsub.f32 1.0, %v95
    %v98 = vadd.f32 %v96, %v97
    %v99 = vlog2.pop %v98
    %v100 = vmul.f32 %v99, 0.6931472
    %v101 = vmul.f32 %v100, %v29
    %vm102 = vcmask 7168
    %v103 = vsel %vm102, %v101, 0.0
    %104 = vadd.xlane.f32.xlu0 %v103
    %v105 = vpop.xlane.xlu0 %104
    %v106 = vrot.slane %v105, 4
    %v107 = vadd.f32 %v105, %v106
    %v108 = vrot.slane %v107, 2
    %v109 = vadd.f32 %v107, %v108
    %v110 = vrot.slane %v109, 1
    %v111 = vadd.f32 %v109, %v110
    %s112 = vtos %v111
    %s113 = scalar_lea.smem [#allocation2], 0
    %114 = sst [smem:[%s113]] %s112
    %v115 = vlog2.pop %v95
    %v116 = vmul.f32 %v115, 0.6931472
    %v117 = vmul.f32 %v116, %v29
    %v118 = vsel %vm102, %v117, 0.0
    %119 = vadd.xlane.f32.xlu0 %v118
    %v120 = vpop.xlane.xlu0 %119
    %v121 = vrot.slane %v120, 4
    %v122 = vadd.f32 %v120, %v121
    %v123 = vrot.slane %v122, 2
    %v124 = vadd.f32 %v122, %v123
    %v125 = vrot.slane %v124, 1
    %v126 = vadd.f32 %v124, %v125
    %s127 = vtos %v126
    %s128 = scalar_lea.smem [#allocation2], 1
    %129 = sst [smem:[%s128]] %s127
    // Predicated region
    $region18: #{tpu_custom_call.1} parent=1 // pred_check
      _
    $region19: #{tpu_custom_call.1} parent=1 // pred_check_branch
      %131 = sbr.rel (0) target = $region21
    $region20: #{tpu_custom_call.1} parent=1 // pred_region
      %133 = vsyncadd [#allocation3], 0
      %s135 = sshll.u32 %s4, 4
      %s136 = int_to_ptr.hbm [resolvable:$true] %s135
      %138 = dma.smem_to_hbm [#allocation2], 16, %s136, [#allocation3]
    $region21: #{tpu_custom_call.1} parent=1 // pred_fallthru
      _
    // Predicated region
    $region22: #{tpu_custom_call.1} parent=1 // pred_check
      _
    $region23: #{tpu_custom_call.1} parent=1 // pred_check_branch
      %140 = sbr.rel (0) target = $region25
    $region24: #{tpu_custom_call.1} parent=1 // pred_region
      %142 = dma.done [#allocation3], 16
    $region25: #{tpu_custom_call.1} parent=1 // pred_fallthru
      _
    %143 = sfence
    %144 = vsyncpa [#allocation3], 1

</llo_original>
